<compile_context>
chip_gen: v7x
topology: tpu7x:2x2x1
jax: 0.10.0
libtpu: 0.0.40
codegen_flags: <defaults>
</compile_context>

<pallas_src>
import numpy as np
import jax
import jax.numpy as jnp
from jax.experimental import pallas as pl
from jax.experimental.pallas import tpu as pltpu


# ----------------------------------------------------------------------------
# Fused kernel: conv-as-matmul (on pre-pooled bf16 im2col patches) + SPADE norm.
# ----------------------------------------------------------------------------
def _spade_fused_kernel(x_ref, p_ref, w_ref, b_ref, o_ref):
    # x_ref: (1, C, T)  p_ref: (1, Kp, T) bf16  w_ref: (2C, Kp) bf16
    # b_ref: (2C, 1) f32  o_ref: (1, C, T)
    C = x_ref.shape[1]

    # Both convs in one native-bf16 MXU matmul with f32 accumulation.
    y = jnp.dot(w_ref[...], p_ref[0],
                preferred_element_type=jnp.float32) + b_ref[...]
    y_scale = y[:C, :]
    y_shift = y[C:, :]

    x = x_ref[0].astype(jnp.float32)                    # (C, T)
    mean = jnp.mean(x, axis=0, keepdims=True)           # (1, T)
    centered = x - mean
    # torch.std default is unbiased (ddof = 1); no epsilon, matching PyTorch.
    ddof = C - 1 if C > 1 else 1
    var = jnp.sum(centered * centered, axis=0, keepdims=True) / ddof
    inv_std = jax.lax.rsqrt(var)
    o_ref[0] = (y_scale * (centered * inv_std) + y_shift).astype(o_ref.dtype)


# ----------------------------------------------------------------------------
# Per-chip VMEM budgeting and lane-dense spatial tiling.
# ----------------------------------------------------------------------------
def _vmem_capacity_bytes():
    try:
        return int(pltpu.get_tpu_info().vmem_capacity_bytes)
    except Exception:
        return 64 << 20  # conservative fallback: v7x per-TensorCore VMEM


def _spatial_tile_cap(C, Kp, x_bytes, out_bytes, vmem_bytes):
    """Largest lane-dense T keeping double-buffered blocks + f32 temps in budget."""
    budget = int(vmem_bytes * 0.70)
    fixed = 2 * (2 * C) * Kp * 2 + 2 * (2 * C) * 4      # weights (bf16) + bias (f32)
    per_col = (2 * C * x_bytes        # x block, double-buffered
               + 2 * Kp * 2           # patches block (bf16), double-buffered
               + 2 * C * out_bytes    # output block, double-buffered
               + 6 * C * 4)           # in-kernel f32 temporaries (y=2C, x/centered/out)
    t = max(budget - fixed, 128 * per_col) // per_col
    return max(128, min((t // 128) * 128, 2048))


def _choose_spatial_tiling(DHW, t_cap):
    """Return (T, padded_DHW): T multiple of 128, T | padded_DHW, T <= t_cap."""
    t_cap = max(128, (t_cap // 128) * 128)
    r128 = ((DHW + 127) // 128) * 128
    if r128 <= t_cap:
        return r128, r128                       # whole spatial axis, one block
    t = t_cap
    while t >= 512:                             # exact divisor -> zero padding
        if DHW % t == 0:
            return t, DHW
        t -= 128
    padded = ((DHW + t_cap - 1) // t_cap) * t_cap
    return t_cap, padded                        # pad <= t_cap-1 cols (negligible)


def _spade_fused_call(x3, patches, wk, bk, T, vmem_cap):
    N, C, DHWp = x3.shape
    Kp = patches.shape[1]
    C2 = wk.shape[0]
    grid = (N, DHWp // T)
    vmem_limit = int(min(vmem_cap * 3 // 4, 100 << 20))
    return pl.pallas_call(
        _spade_fused_kernel,
        out_shape=jax.ShapeDtypeStruct((N, C, DHWp), x3.dtype),
        grid=grid,
        in_specs=[
            pl.BlockSpec((1, C, T), lambda n, s: (n, 0, s)),
            pl.BlockSpec((1, Kp, T), lambda n, s: (n, 0, s)),
            pl.BlockSpec((C2, Kp), lambda n, s: (0, 0)),   # grid-constant weights
            pl.BlockSpec((C2, 1), lambda n, s: (0, 0)),    # grid-constant bias
        ],
        out_specs=pl.BlockSpec((1, C, T), lambda n, s: (n, 0, s)),
        compiler_params=pltpu.CompilerParams(
            dimension_semantics=("parallel", "parallel"),
            vmem_limit_bytes=vmem_limit),
    )(x3, patches, wk, bk)


# ----------------------------------------------------------------------------
# SPADE.forward
# ----------------------------------------------------------------------------
def spade_forward(x, style, w_scale, b_scale, w_shift, b_shift):
    # x: (N, C, D, H, W), style: (N, Cin, Ds, Hs, Ws)   (PyTorch NCDHW)
    N, C, D, H, W = x.shape
    _, Cin, Ds, Hs, Ws = style.shape
    assert w_scale.shape[0] == C

    # F.interpolate(mode='area') with integer factors == exact block mean and
    # commutes with the (linear) conv -> pool the im2col taps instead of the
    # full-resolution conv output.
    # TODO(synk): non-integer area-interp factors would need adaptive pooling.
    assert Ds % D == 0 and Hs % H == 0 and Ws % W == 0
    fd, fh, fw = Ds // D, Hs // H, Ws // W
    DHW = D * H * W

    # 3x3 im2col of the zero-padded style (kernel depth 1 -> no depth taps),
    # pooled tap-by-tap so peak HBM temporary is ONE full-resolution tap.
    # K-order is (dy, dx, cin), matching the weight layout below.
    sp = jnp.pad(style, ((0, 0), (0, 0), (0, 0), (1, 1), (1, 1)))
    pooled = []
    for dy in range(3):
        for dx in range(3):
            tap = sp[:, :, :, dy:dy + Hs, dx:dx + Ws]
            pooled.append(
                tap.reshape(N, Cin, D, fd, H, fh, W, fw).mean(axis=(3, 5, 7)))
    patches = jnp.stack(pooled, axis=1)                     # (N, 9, Cin, D, H, W)
    patches = patches.reshape(N, 9 * Cin, DHW).astype(jnp.bfloat16)

    # Fused conv weights: rows = [scale; shift] channels, K = (dy, dx, cin)
    # padded to a multiple of 16 (clean bf16 sublane packing).
    K = 9 * Cin
    Kp = ((K + 15) // 16) * 16
    w = jnp.concatenate([w_scale, w_shift], axis=0)[:, :, 0]   # (2C, Cin, 3, 3)
    wk = jnp.transpose(w, (0, 2, 3, 1)).reshape(2 * C, K).astype(jnp.bfloat16)
    if Kp != K:
        wk = jnp.pad(wk, ((0, 0), (0, Kp - K)))
        patches = jnp.pad(patches, ((0, 0), (0, Kp - K), (0, 0)))
    bk = jnp.concatenate([b_scale, b_shift]).reshape(2 * C, 1).astype(jnp.float32)

    # x stays channel-major: (N, C, DHW) is a contiguous (free) reshape.
    x3 = x.reshape(N, C, DHW)
    xb = x3.dtype.itemsize
    vmem_cap = _vmem_capacity_bytes()
    t_cap = _spatial_tile_cap(C, Kp, xb, xb, vmem_cap)
    T, padded = _choose_spatial_tiling(DHW, t_cap)

    # v7x has 2 TensorCores: keep >= 2 parallel grid steps when possible.
    if N * (padded // T) < 2 and padded >= 256:
        padded = ((padded + 255) // 256) * 256
        T = padded // 2

    if padded != DHW:
        x3 = jnp.pad(x3, ((0, 0), (0, 0), (0, padded - DHW)))
        patches = jnp.pad(patches, ((0, 0), (0, 0), (0, padded - DHW)))

    out3 = _spade_fused_call(x3, patches, wk, bk, T, vmem_cap)
    if padded != DHW:
        out3 = out3[:, :, :DHW]     # padded columns (rsqrt(0) -> NaN) discarded
    return out3.reshape(N, C, D, H, W)


# ----------------------------------------------------------------------------
# Pure-JAX f32 reference (mirrors the PyTorch forward) for verification.
# ----------------------------------------------------------------------------
def spade_reference(x, style, w_scale, b_scale, w_shift, b_shift):
    N, C, D, H, W = x.shape

    def conv(s, w, b):
        out = jax.lax.conv_general_dilated(
            s, w, window_strides=(1, 1, 1),
            padding=((0, 0), (1, 1), (1, 1)),
            dimension_numbers=('NCDHW', 'OIDHW', 'NCDHW'))
        return out + b[None, :, None, None, None]

    ys = conv(style, w_scale, b_scale)
    yb = conv(style, w_shift, b_shift)
    _, _, Ds, Hs, Ws = ys.shape
    fd, fh, fw = Ds // D, Hs // H, Ws // W

    def area(y):
        return y.reshape(N, C, D, fd, H, fh, W, fw).mean(axis=(3, 5, 7))

    ys, yb = area(ys), area(yb)
    mean = x.mean(axis=1, keepdims=True)
    std = jnp.sqrt(((x - mean) ** 2).sum(axis=1, keepdims=True) / (C - 1))
    return ys * ((x - mean) / std) + yb


if __name__ == "__main__":
    key = jax.random.PRNGKey(0)
    k1, k2, k3, k4, k5, k6 = jax.random.split(key, 6)

    N, Cin, Cout = 2, 4, 4          # in_channels=4, out_channels=4 (= x channels)
    D, H, W = 3, 8, 8               # x spatial size
    Ds, Hs, Ws = 3, 16, 16          # style spatial size (integer area factors)

    x = jax.random.normal(k1, (N, Cout, D, H, W), jnp.float32)
    style = jax.random.normal(k2, (N, Cin, Ds, Hs, Ws), jnp.float32)
    # deterministic synthetic Conv3d parameters: (out, in, 1, 3, 3) + (out,)
    w_scale = 0.1 * jax.random.normal(k3, (Cout, Cin, 1, 3, 3), jnp.float32)
    b_scale = 0.1 * jax.random.normal(k4, (Cout,), jnp.float32)
    w_shift = 0.1 * jax.random.normal(k5, (Cout, Cin, 1, 3, 3), jnp.float32)
    b_shift = 0.1 * jax.random.normal(k6, (Cout,), jnp.float32)

    out = jax.jit(spade_forward)(x, style, w_scale, b_scale, w_shift, b_shift)
    out = jax.block_until_ready(out)

    ref = spade_reference(x, style, w_scale, b_scale, w_shift, b_shift)
    # bf16 patches/weights with f32 accumulation -> slightly looser tolerance.
    np.testing.assert_allclose(np.asarray(out), np.asarray(ref),
                               rtol=2e-2, atol=2e-2)
    print("KERNEL_OK")
</pallas_src>

<mosaic_0001>
module attributes {stable_mosaic.version = 11 : i64} {
  func.func @_spade_fused_kernel(%arg0: i32, %arg1: i32, %arg2: memref<1x4x256xf32, #tpu.memory_space<vmem>>, %arg3: memref<1x48x256xbf16, #tpu.memory_space<vmem>>, %arg4: memref<8x48xbf16, #tpu.memory_space<vmem>>, %arg5: memref<8x1xf32, #tpu.memory_space<vmem>>, %arg6: memref<1x4x256xf32, #tpu.memory_space<vmem>>) attributes {dimension_semantics = [#tpu.dimension_semantics<parallel>, #tpu.dimension_semantics<parallel>], iteration_bounds = array<i64: 2, 1>, scalar_prefetch = 0 : i64, scratch_operands = 0 : i64, tpu.core_type = #tpu.core_type<tc>, window_params = [{transform_indices = @transform_0, window_bounds = array<i64: 1, 4, 256>}, {transform_indices = @transform_1, window_bounds = array<i64: 1, 48, 256>}, {pipeline_mode = #tpu.pipeline_mode<synchronous>, transform_indices = @transform_2, window_bounds = array<i64: 8, 48>}, {pipeline_mode = #tpu.pipeline_mode<synchronous>, transform_indices = @transform_3, window_bounds = array<i64: 8, 1>}, {transform_indices = @transform_4, window_bounds = array<i64: 1, 4, 256>}]} {
    %c0 = arith.constant 0 : index
    %c0_0 = arith.constant 0 : index
    %0 = vector.load %arg4[%c0, %c0_0] : memref<8x48xbf16, #tpu.memory_space<vmem>>, vector<8x48xbf16>
    %c0_1 = arith.constant 0 : index
    %c0_2 = arith.constant 0 : index
    %c0_3 = arith.constant 0 : index
    %1 = vector.load %arg3[%c0_1, %c0_2, %c0_3] : memref<1x48x256xbf16, #tpu.memory_space<vmem>>, vector<1x48x256xbf16>
    %2 = vector.shape_cast %1 : vector<1x48x256xbf16> to vector<48x256xbf16>
    %cst = arith.constant dense<0.000000e+00> : vector<8x256xf32>
    %3 = tpu.matmul %0, %2, %cst {dimension_numbers = #tpu.dot_dimension_numbers<[1], [0], [0], [1], [0, 0, 1, 1], [], []>} : vector<8x48xbf16>, vector<48x256xbf16>, vector<8x256xf32> -> vector<8x256xf32>
    %c0_4 = arith.constant 0 : index
    %c0_5 = arith.constant 0 : index
    %4 = vector.load %arg5[%c0_4, %c0_5] : memref<8x1xf32, #tpu.memory_space<vmem>>, vector<8x1xf32>
    %5 = vector.broadcast %4 : vector<8x1xf32> to vector<8x256xf32>
    %6 = arith.addf %3, %5 : vector<8x256xf32>
    %7 = vector.extract_strided_slice %6 {offsets = [0, 0], sizes = [4, 256], strides = [1, 1]} : vector<8x256xf32> to vector<4x256xf32>
    %8 = vector.extract_strided_slice %6 {offsets = [4, 0], sizes = [4, 256], strides = [1, 1]} : vector<8x256xf32> to vector<4x256xf32>
    %c0_6 = arith.constant 0 : index
    %c0_7 = arith.constant 0 : index
    %c0_8 = arith.constant 0 : index
    %9 = vector.load %arg2[%c0_6, %c0_7, %c0_8] : memref<1x4x256xf32, #tpu.memory_space<vmem>>, vector<1x4x256xf32>
    %10 = vector.shape_cast %9 : vector<1x4x256xf32> to vector<4x256xf32>
    %cst_9 = arith.constant dense<0.000000e+00> : vector<256xf32>
    %11 = vector.multi_reduction <add>, %10, %cst_9 [0] : vector<4x256xf32> to vector<256xf32>
    %12 = vector.shape_cast %11 : vector<256xf32> to vector<1x256xf32>
    %cst_10 = arith.constant 4.000000e+00 : f32
    %13 = vector.broadcast %cst_10 : f32 to vector<1x256xf32>
    %14 = arith.divf %12, %13 : vector<1x256xf32>
    %15 = vector.broadcast %14 : vector<1x256xf32> to vector<4x256xf32>
    %16 = arith.subf %10, %15 : vector<4x256xf32>
    %17 = arith.mulf %16, %16 : vector<4x256xf32>
    %cst_11 = arith.constant dense<0.000000e+00> : vector<256xf32>
    %18 = vector.multi_reduction <add>, %17, %cst_11 [0] : vector<4x256xf32> to vector<256xf32>
    %19 = vector.shape_cast %18 : vector<256xf32> to vector<1x256xf32>
    %cst_12 = arith.constant 3.000000e+00 : f32
    %20 = vector.broadcast %cst_12 : f32 to vector<1x256xf32>
    %21 = arith.divf %19, %20 : vector<1x256xf32>
    %22 = math.rsqrt %21 : vector<1x256xf32>
    %23 = vector.broadcast %22 : vector<1x256xf32> to vector<4x256xf32>
    %24 = arith.mulf %16, %23 : vector<4x256xf32>
    %25 = arith.mulf %7, %24 : vector<4x256xf32>
    %26 = arith.addf %25, %8 : vector<4x256xf32>
    %c0_13 = arith.constant 0 : index
    %c0_14 = arith.constant 0 : index
    %c0_15 = arith.constant 0 : index
    %27 = vector.load %arg6[%c0_13, %c0_14, %c0_15] : memref<1x4x256xf32, #tpu.memory_space<vmem>>, vector<1x4x256xf32>
    %28 = vector.shape_cast %27 : vector<1x4x256xf32> to vector<4x256xf32>
    %29 = vector.shape_cast %26 : vector<4x256xf32> to vector<1x4x256xf32>
    tpu.vector_store %arg6[%c0_13, %c0_14, %c0_15], %29 {strides = array<i32>} : memref<1x4x256xf32, #tpu.memory_space<vmem>>, vector<1x4x256xf32>,
    return
  }
  func.func @transform_0(%arg0: i32, %arg1: i32) -> (i32, i32, i32) {
    %c0_i32 = arith.constant 0 : i32
    %c0_i32_0 = arith.constant 0 : i32
    return %arg0, %c0_i32, %arg1 : i32, i32, i32
  }
  func.func @transform_1(%arg0: i32, %arg1: i32) -> (i32, i32, i32) {
    %c0_i32 = arith.constant 0 : i32
    %c0_i32_0 = arith.constant 0 : i32
    return %arg0, %c0_i32, %arg1 : i32, i32, i32
  }
  func.func @transform_2(%arg0: i32, %arg1: i32) -> (i32, i32) {
    %c0_i32 = arith.constant 0 : i32
    %c0_i32_0 = arith.constant 0 : i32
    %c0_i32_1 = arith.constant 0 : i32
    return %c0_i32, %c0_i32_0 : i32, i32
  }
  func.func @transform_3(%arg0: i32, %arg1: i32) -> (i32, i32) {
    %c0_i32 = arith.constant 0 : i32
    %c0_i32_0 = arith.constant 0 : i32
    %c0_i32_1 = arith.constant 0 : i32
    return %c0_i32, %c0_i32_0 : i32, i32
  }
  func.func @transform_4(%arg0: i32, %arg1: i32) -> (i32, i32, i32) {
    %c0_i32 = arith.constant 0 : i32
    %c0_i32_0 = arith.constant 0 : i32
    return %arg0, %c0_i32, %arg1 : i32, i32, i32
  }
}

</mosaic_0001>

<llo_original>
// kernel: spade_forward.1
$region0: #{spade_forward.1}
  #allocation0 [shape = 'u32[]', space=smem, size = 0x4, offset = 0x4, fixed_abs, tag = 'smem constant byte address 0x4 - core index']
  #allocation1 [shape = 'u32[144,128]{1,0:T(1,128)}', space=vmem, size = 0x12000, scoped, tag = 'internal scratch']
  %s0 = inlined_call_operand.vmem [shape: f32[2,4,256], index: 0, kind: input, shape index: {}]
  %s1 = inlined_call_operand.vmem [shape: bf16[2,48,256], index: 1, kind: input, shape index: {}]
  %s2 = inlined_call_operand.vmem [shape: bf16[8,48], index: 2, kind: input, shape index: {}]
  %s3 = inlined_call_operand.vmem [shape: f32[8,1], index: 3, kind: input, shape index: {}]
  %s4 = inlined_call_operand.vmem [shape: f32[2,4,256], index: 4, kind: output, shape index: {}]
  %s5 = sld [smem:[#allocation0]]
  $region49: #{spade_forward.1} parent=0
    _
  %s7 = ssub.s32 1, %s5
  %s8 = scalar_select 0, %s7, %s5
  loop: start=0, step=1, limit=4
  $region2: #{spade_forward.1} parent=0 // loop_pre_header
    _
  $region3: #{spade_forward.1} parent=0 // loop_header
    %s10 = sphi 0, %s14
    %p11 = scmp.ge.s32.totalorder %s10, 4
    %s17 = sphi 0, %s29
    %s18 = sphi 0, %s25
    %s19 = sphi 0, %s17
    %s20 = sphi 0, %s18
    %s21 = sphi 0, %s19
    %s22 = sphi 0, %s20
    %s34 = sphi 0, %s36
    %s37 = sphi 0, %s34
    %s38 = sphi 0, %s37
    %s54 = sphi 0, %s38
    %s62 = sphi 0, %s64
    %s65 = sphi 0, %s62
    %s66 = sphi 0, %s65
    %s82 = sphi 0, %s66
    %s86 = sphi 0, %s86
    %s88 = sphi 0, %s86
    %s89 = sphi 0, %s88
    %s103 = sphi 0, %s89
    %s107 = sphi 0, %s107
    %s109 = sphi 0, %s107
    %s110 = sphi 0, %s109
    %s124 = sphi 0, %s110
    %s132 = sphi 0, %s134
    %s135 = sphi 0, %s132
    %s136 = sphi 0, %s135
    %s152 = sphi 0, %s136
  $region4: #{spade_forward.1} parent=0 // loop_header_branch
    %13 = sbr.rel (%p11) target = $region8
  $region5: #{spade_forward.1} parent=0 // loop_body
    %s15 = ssub.s32 %s10, 1
    %s16 = ssub.s32 %s10, 2
    %s23 = sadd.s32 1, %s18
    %p24 = scmp.ge.s32.totalorder %s23, 1
    %s25 = scalar_select %p24, 0, %s23
    %s26 = sadd.s32 1, %s17
    %s27 = scalar_select %p24, %s26, %s17
    %p28 = scmp.ge.s32.totalorder %s27, 2
    %s29 = scalar_select %p28, 0, %s27
    %s30 = ssub.s32 %s17, %s29
    %s31 = ssub.s32 %s18, %s25
    %s32 = sor.u32 %s30, %s31
    %p33 = scmp.eq.s32.totalorder %s32, 0
    %s35 = sadd.s32 %s34, 1
    %s36 = scalar_select %p33, %s34, %s35
    %p39 = pneg %p33
    %p40 = scmp.eq.s32.totalorder %s10, 1
    %p41 = por %p39, %p40
    %p42 = scmp.ne.s32.totalorder %s34, %s37
    %p43 = scmp.eq.s32.totalorder %s10, 0
    %p44 = por %p42, %p43
    %p45 = scmp.ne.s32.totalorder %s34, %s37
    %p46 = scmp.eq.s32.totalorder %s15, 1
    %p47 = por %p45, %p46
    %p48 = scmp.ne.s32.totalorder %s37, %s38
    %p49 = scmp.eq.s32.totalorder %s15, 0
    %p50 = por %p48, %p49
    %p51 = scmp.ne.s32.totalorder %s37, %s38
    %p52 = scmp.eq.s32.totalorder %s16, 1
    %p53 = por %p51, %p52
    %p55 = scmp.ne.s32.totalorder %s38, %s54
    %p56 = scmp.eq.s32.totalorder %s16, 0
    %p57 = por %p55, %p56
    %s58 = ssub.s32 %s17, %s29
    %s59 = ssub.s32 %s18, %s25
    %s60 = sor.u32 %s58, %s59
    %p61 = scmp.eq.s32.totalorder %s60, 0
    %s63 = sadd.s32 %s62, 1
    %s64 = scalar_select %p61, %s62, %s63
    %p67 = pneg %p61
    %p68 = scmp.eq.s32.totalorder %s10, 1
    %p69 = por %p67, %p68
    %p70 = scmp.ne.s32.totalorder %s62, %s65
    %p71 = scmp.eq.s32.totalorder %s10, 0
    %p72 = por %p70, %p71
    %p73 = scmp.ne.s32.totalorder %s62, %s65
    %p74 = scmp.eq.s32.totalorder %s15, 1
    %p75 = por %p73, %p74
    %p76 = scmp.ne.s32.totalorder %s65, %s66
    %p77 = scmp.eq.s32.totalorder %s15, 0
    %p78 = por %p76, %p77
    %p79 = scmp.ne.s32.totalorder %s65, %s66
    %p80 = scmp.eq.s32.totalorder %s16, 1
    %p81 = por %p79, %p80
    %p83 = scmp.ne.s32.totalorder %s66, %s82
    %p84 = scmp.eq.s32.totalorder %s16, 0
    %p85 = por %p83, %p84
    %s87 = sadd.s32 %s86, 1
    %p90 = scmp.eq.s32.totalorder %s10, 1
    %p91 = scmp.ne.s32.totalorder %s86, %s88
    %p92 = scmp.eq.s32.totalorder %s10, 0
    %p93 = por %p91, %p92
    %p94 = scmp.ne.s32.totalorder %s86, %s88
    %p95 = scmp.eq.s32.totalorder %s15, 1
    %p96 = por %p94, %p95
    %p97 = scmp.ne.s32.totalorder %s88, %s89
    %p98 = scmp.eq.s32.totalorder %s15, 0
    %p99 = por %p97, %p98
    %p100 = scmp.ne.s32.totalorder %s88, %s89
    %p101 = scmp.eq.s32.totalorder %s16, 1
    %p102 = por %p100, %p101
    %p104 = scmp.ne.s32.totalorder %s89, %s103
    %p105 = scmp.eq.s32.totalorder %s16, 0
    %p106 = por %p104, %p105
    %s108 = sadd.s32 %s107, 1
    %p111 = scmp.eq.s32.totalorder %s10, 1
    %p112 = scmp.ne.s32.totalorder %s107, %s109
    %p113 = scmp.eq.s32.totalorder %s10, 0
    %p114 = por %p112, %p113
    %p115 = scmp.ne.s32.totalorder %s107, %s109
    %p116 = scmp.eq.s32.totalorder %s15, 1
    %p117 = por %p115, %p116
    %p118 = scmp.ne.s32.totalorder %s109, %s110
    %p119 = scmp.eq.s32.totalorder %s15, 0
    %p120 = por %p118, %p119
    %p121 = scmp.ne.s32.totalorder %s109, %s110
    %p122 = scmp.eq.s32.totalorder %s16, 1
    %p123 = por %p121, %p122
    %p125 = scmp.ne.s32.totalorder %s110, %s124
    %p126 = scmp.eq.s32.totalorder %s16, 0
    %p127 = por %p125, %p126
    %s128 = ssub.s32 %s17, %s29
    %s129 = ssub.s32 %s18, %s25
    %s130 = sor.u32 %s128, %s129
    %p131 = scmp.eq.s32.totalorder %s130, 0
    %s133 = sadd.s32 %s132, 1
    %s134 = scalar_select %p131, %s132, %s133
    %p137 = pneg %p131
    %p138 = scmp.eq.s32.totalorder %s10, 1
    %p139 = por %p137, %p138
    %p140 = scmp.ne.s32.totalorder %s132, %s135
    %p141 = scmp.eq.s32.totalorder %s10, 0
    %p142 = por %p140, %p141
    %p143 = scmp.ne.s32.totalorder %s132, %s135
    %p144 = scmp.eq.s32.totalorder %s15, 1
    %p145 = por %p143, %p144
    %p146 = scmp.ne.s32.totalorder %s135, %s136
    %p147 = scmp.eq.s32.totalorder %s15, 0
    %p148 = por %p146, %p147
    %p149 = scmp.ne.s32.totalorder %s135, %s136
    %p150 = scmp.eq.s32.totalorder %s16, 1
    %p151 = por %p149, %p150
    %p153 = scmp.ne.s32.totalorder %s136, %s152
    %p154 = scmp.eq.s32.totalorder %s16, 0
    %p155 = por %p153, %p154
    %p156 = scmp.le.s32.totalorder 1, %s10
    %p157 = scmp.lt.s32.totalorder %s10, 3
    %p158 = pnand %p156, %p157
    %p159 = pneg %p158
    // Predicated region
    $region9: #{spade_forward.1} parent=5 // pred_check
      _
    $region10: #{spade_forward.1} parent=5 // pred_check_branch
      %161 = sbr.rel (%p158) target = $region12
    $region11: #{spade_forward.1} parent=5 // pred_region
      %s162 = ssub.s32 %s10, 1
      // Predicated region
      $region13: #{spade_forward.1} parent=11 // pred_check
        %p163 = pneg %p99
      $region14: #{spade_forward.1} parent=11 // pred_check_branch
        %165 = sbr.rel (%p163) target = $region16
      $region15: #{spade_forward.1} parent=11 // pred_region
        _
      $region16: #{spade_forward.1} parent=11 // pred_fallthru
        _
      // Predicated region
      $region17: #{spade_forward.1} parent=11 // pred_check
        %p166 = pneg %p120
      $region18: #{spade_forward.1} parent=11 // pred_check_branch
        %168 = sbr.rel (%p166) target = $region20
      $region19: #{spade_forward.1} parent=11 // pred_region
        _
      $region20: #{spade_forward.1} parent=11 // pred_fallthru
        _
    $region12: #{spade_forward.1} parent=5 // pred_fallthru
      _
    %p169 = scmp.lt.s32.totalorder %s10, 2
    // Predicated region
    $region21: #{spade_forward.1} parent=5 // pred_check
      %p170 = pneg %p169
    $region22: #{spade_forward.1} parent=5 // pred_check_branch
      %172 = sbr.rel (%p170) target = $region24
    $region23: #{spade_forward.1} parent=5 // pred_region
      // Predicated region
      $region25: #{spade_forward.1} parent=23 // pred_check
        %p173 = pneg %p44
      $region26: #{spade_forward.1} parent=23 // pred_check_branch
        %175 = sbr.rel (%p173) target = $region28
      $region27: #{spade_forward.1} parent=23 // pred_region
        %s176 = smul.u32 2, %s18
        %p177 = scmp.lt.s32.totalorder %s17, 1
        %s178 = scalar_select %p177, %s17, 1
        %p179 = scmp.lt.s32.totalorder %s176, 1
        %s180 = scalar_select %p179, %s176, 1
        %s181 = smul.addr %s178, 2
        %s182 = sadd.s32 %s180, %s181
        %s183 = smul.addr %s182, 4
        %s184 = scalar_lea.vmem %s0, %s183
        %s185 = smul.u32 2, %s18
      $region28: #{spade_forward.1} parent=23 // pred_fallthru
        _
      // Predicated region
      $region29: #{spade_forward.1} parent=23 // pred_check
        %p186 = pneg %p72
      $region30: #{spade_forward.1} parent=23 // pred_check_branch
        %188 = sbr.rel (%p186) target = $region32
      $region31: #{spade_forward.1} parent=23 // pred_region
        %s189 = smul.u32 2, %s18
        %p190 = scmp.lt.s32.totalorder %s17, 1
        %s191 = scalar_select %p190, %s17, 1
        %p192 = scmp.lt.s32.totalorder %s189, 1
        %s193 = scalar_select %p192, %s189, 1
        %s194 = smul.addr %s191, 12
        %s195 = sadd.s32 %s193, %s194
        %s196 = smul.addr %s195, 4
        %s197 = scalar_lea.vmem %s1, %s196
        %s198 = smul.u32 2, %s18
      $region32: #{spade_forward.1} parent=23 // pred_fallthru
        _
    $region24: #{spade_forward.1} parent=5 // pred_fallthru
      _
    %p199 = scmp.le.s32.totalorder 1, %s10
    %p200 = scmp.lt.s32.totalorder %s10, 3
    %p201 = pnand %p199, %p200
    %p202 = pneg %p201
    // Predicated region
    $region33: #{spade_forward.1} parent=5 // pred_check
      _
    $region34: #{spade_forward.1} parent=5 // pred_check_branch
      %204 = sbr.rel (%p201) target = $region36
    $region35: #{spade_forward.1} parent=5 // pred_region
      %s205 = ssub.s32 %s10, 1
      %s206 = smul.u32 2, %s20
      %p207 = scmp.lt.s32.totalorder %s19, 1
      %s208 = scalar_select %p207, %s19, 1
      %p209 = scmp.lt.s32.totalorder %s206, 1
      %s210 = scalar_select %p209, %s206, 1
      %s211 = smul.addr %s208, 2
      %s212 = sadd.s32 %s210, %s211
      %s213 = smul.addr %s212, 4
      %s214 = scalar_lea.vmem %s0, %s213
      %p215 = pneg %p50
      %p216 = pneg %p47
      %s217 = smul.u32 2, %s20
      %p218 = scmp.lt.s32.totalorder %s19, 1
      %s219 = scalar_select %p218, %s19, 1
      %p220 = scmp.lt.s32.totalorder %s217, 1
      %s221 = scalar_select %p220, %s217, 1
      %s222 = smul.addr %s219, 12
      %s223 = sadd.s32 %s221, %s222
      %s224 = smul.addr %s223, 4
      %s225 = scalar_lea.vmem %s1, %s224
      %p226 = pneg %p78
      %p227 = pneg %p75
      %p228 = pneg %p99
      %p229 = pneg %p96
      %p230 = pneg %p120
      %p231 = pneg %p117
      %p232 = pneg %p148
      %p233 = pneg %p145
      %s234 = smul.u32 2, %s20
      %p235 = scmp.lt.s32.totalorder %s19, 1
      %s236 = scalar_select %p235, %s19, 1
      %p237 = scmp.lt.s32.totalorder %s234, 1
      %s238 = scalar_select %p237, %s234, 1
      %s239 = smul.addr %s236, 2
      %s240 = sadd.s32 %s238, %s239
      %s241 = smul.addr %s240, 4
      %s242 = scalar_lea.vmem %s4, %s241
      %s243 = smul.u32 2, %s20
      %p244 = scmp.lt.s32.totalorder %s19, 1
      %s245 = scalar_select %p244, %s19, 1
      %p246 = scmp.lt.s32.totalorder %s243, 1
      %s247 = scalar_select %p246, %s243, 1
      %s248 = smul.addr %s245, 2
      %s249 = sadd.s32 %s247, %s248
      %s250 = smul.addr %s249, 4
      %s251 = scalar_lea.vmem %s0, %s250
      %s252 = smul.u32 2, %s20
      %s253 = smul.u32 2, %s20
      %p254 = scmp.lt.s32.totalorder %s19, 1
      %s255 = scalar_select %p254, %s19, 1
      %p256 = scmp.lt.s32.totalorder %s253, 1
      %s257 = scalar_select %p256, %s253, 1
      %s258 = smul.addr %s255, 12
      %s259 = sadd.s32 %s257, %s258
      %s260 = smul.addr %s259, 4
      %s261 = scalar_lea.vmem %s1, %s260
      %s262 = smul.u32 2, %s20
      %s263 = smul.u32 2, %s20
      %p264 = scmp.lt.s32.totalorder %s19, 1
      %s265 = scalar_select %p264, %s19, 1
      %p266 = scmp.lt.s32.totalorder %s263, 1
      %s267 = scalar_select %p266, %s263, 1
      %s268 = smul.addr %s265, 2
      %s269 = sadd.s32 %s267, %s268
      %s270 = smul.addr %s269, 4
      %s271 = scalar_lea.vmem %s4, %s270
      %s272 = smul.u32 2, %s20
      %v274 = vld [vmem:[%s2] sm:$0xf]
      %v275 = vld [vmem:[%s261] sm:$0xff]
      %v276 = vld [vmem:[%s261 + $0x8] sm:$0xff]
      %v277 = vld [vmem:[%s261 + $0x10] sm:$0xff]
      %v278 = vld [vmem:[%s261 + $0x18] sm:$0xff]
      %v279 = vld [vmem:[%s261 + $0x20] sm:$0xff]
      %v280 = vld [vmem:[%s261 + $0x28] sm:$0xff]
      %v281 = vld [vmem:[%s3] sm:$0xff]
      %283 = vset.pattern.permute.xlu0 0
      %284 = vperm.xlu0 %283, %v281
      %v285 = vpop.permute.xlu0 %284
      %v293 = vunpack.c.l.b16 %v275
      %v294 = vunpack.c.h.b16 %v275
      %v295 = vunpack.c.l.b16 %v276
      %v296 = vunpack.c.h.b16 %v276
      %v297 = vunpack.c.l.b16 %v277
      %v298 = vunpack.c.h.b16 %v277
      %v299 = vunpack.c.l.b16 %v278
      %v300 = vunpack.c.h.b16 %v278
      %v301 = vunpack.c.l.b16 %v279
      %v302 = vunpack.c.h.b16 %v279
      %v303 = vunpack.c.l.b16 %v280
      %v304 = vunpack.c.h.b16 %v280
      %v305 = vpack.c.b16 %v295, %v293
      %v306 = vpack.c.b16 %v296, %v294
      %v307 = vpack.c.b16 %v299, %v297
      %v308 = vpack.c.b16 %v300, %v298
      %v309 = vpack.c.b16 %v303, %v301
      %v310 = vpack.c.b16 %v304, %v302
      %vm317 = vcmask 392192
      %v319 = vsel %vm317, %v274, 0
      %321 = vmatprep.subr.bf16.mxu0 %v306
      %322 = vmatpush1.bf16.msra.mxu0 %v305
      %323 = vmatprep.subr.bf16.mxu0 %v308
      %324 = vmatpush1.bf16.msra.mxu0 %v307
      %325 = vmatprep.subr.bf16.mxu0 %v310
      %326 = vmatpush1.bf16.msra.mxu0 %v309
      %327 = vmatprep.subr.bf16.mxu0 0
      %328 = vmatpush1.bf16.msra.mxu0 0
      %329 = vmatprep.subr.bf16.mxu0 0
      %330 = vmatpush1.bf16.msra.mxu0 0
      %331 = vmatprep.subr.bf16.mxu0 0
      %332 = vmatpush1.bf16.msra.mxu0 0
      %333 = vmatprep.subr.bf16.mxu0 0
      %334 = vmatpush1.bf16.msra.mxu0 0
      %335 = vmatprep.subr.bf16.mxu0 0
      %336 = vmatpush1.bf16.msra.mxu0 0
      %337 = vmatprep.subr.bf16.mxu0 0
      %338 = vmatpush1.bf16.msra.mxu0 0
      %339 = vmatprep.subr.bf16.mxu0 0
      %340 = vmatpush1.bf16.msra.mxu0 0
      %341 = vmatprep.subr.bf16.mxu0 0
      %342 = vmatpush1.bf16.msra.mxu0 0
      %343 = vmatprep.subr.bf16.mxu0 0
      %344 = vmatpush1.bf16.msra.mxu0 0
      %345 = vmatprep.subr.bf16.mxu0 0
      %346 = vmatpush1.bf16.msra.mxu0 0
      %347 = vmatprep.subr.bf16.mxu0 0
      %348 = vmatpush1.bf16.msra.mxu0 0
      %349 = vmatprep.subr.bf16.mxu0 0
      %350 = vmatpush1.bf16.msra.mxu0 0
      %351 = vmatprep.subr.bf16.mxu0 0
      %352 = vmatpush1.bf16.msra.mxu0 0
      %353 = vmatprep.mubr.bf16.mxu0 0
      %354 = vmatmul.mubr.bf16.gmra.mrb[0].mxu0 %v319
      %v355 = vpop.f32.mrb[0].mxu0
      %v356 = vadd.f32 %v285, %v355
      %v357 = vpop.f32.mrb[0].mxu0
      %v358 = vadd.f32 %v285, %v357
      %v359 = vpop.f32.mrb[0].mxu0
      %v360 = vpop.f32.mrb[0].mxu0
      %361 = vdwg.mxu0
      %v362 = vld [vmem:[%s251] sm:$0xff]
      %v364 = vcombine.high %v362, %v362
      %vm366 = vcmask 1043456
      %v367 = vsel %vm366, %v362, 0.0
      %v368 = vrot.slane %v367, 4
      %v369 = vadd.f32 %v367, %v368
      %v370 = vrot.slane %v369, 2
      %v371 = vadd.f32 %v369, %v370
      %v372 = vrot.slane %v371, 1
      %v373 = vadd.f32 %v371, %v372
      %v374 = vsel %vm366, %v364, 0.0
      %v375 = vrot.slane %v374, 4
      %v376 = vadd.f32 %v374, %v375
      %v377 = vrot.slane %v376, 2
      %v378 = vadd.f32 %v376, %v377
      %v379 = vrot.slane %v378, 1
      %v380 = vadd.f32 %v378, %v379
      %v381 = vrcp.pop 4.0
      %v382 = vmul.f32 %v373, %v381
      %v383 = vmul.f32 %v380, %v381
      %v386 = vcombine.low %v382, %v383
      %v388 = vsub.f32 %v362, %v386
      %v389 = vmul.f32 %v388, %v388
      %v391 = vcombine.high %v389, %v389
      %v393 = vsel %vm366, %v389, 0.0
      %v394 = vrot.slane %v393, 4
      %v395 = vadd.f32 %v393, %v394
      %v396 = vrot.slane %v395, 2
      %v397 = vadd.f32 %v395, %v396
      %v398 = vrot.slane %v397, 1
      %v399 = vadd.f32 %v397, %v398
      %v400 = vsel %vm366, %v391, 0.0
      %v401 = vrot.slane %v400, 4
      %v402 = vadd.f32 %v400, %v401
      %v403 = vrot.slane %v402, 2
      %v404 = vadd.f32 %v402, %v403
      %v405 = vrot.slane %v404, 1
      %v406 = vadd.f32 %v404, %v405
      %v407 = vrcp.pop 3.0
      %v408 = vmul.f32 %v399, %v407
      %v409 = vmul.f32 %v406, %v407
      %v410 = vrsqrt.pop %v408
      %v411 = vrsqrt.pop %v409
      %v414 = vcombine.low %v410, %v411
      %v416 = vmul.f32 %v388, %v414
      %v418 = vcombine.high %v416, %v416
      %v420 = vmul.f32 %v356, %v416
      %v421 = vmul.f32 %v358, %v418
      %v424 = vrot.slane %v356, 4
      %v425 = vrot.slane %v358, 4
      %v428 = vadd.f32 %v420, %v424
      %v429 = vadd.f32 %v421, %v425
      %v432 = vcombine.low %v428, %v429
      %434 = vst [vmem:[%s271] sm:$0xff] %v432
      %s435 = smul.u32 2, %s20
      %p436 = scmp.lt.s32.totalorder %s19, 1
      %s437 = scalar_select %p436, %s19, 1
      %p438 = scmp.lt.s32.totalorder %s435, 1
      %s439 = scalar_select %p438, %s435, 1
      %s440 = smul.addr %s437, 2
      %s441 = sadd.s32 %s439, %s440
      %s442 = smul.addr %s441, 4
      %s443 = scalar_lea.vmem %s4, %s442
      // Predicated region
      $region37: #{spade_forward.1} parent=35 // pred_check
        %p444 = pneg %p145
      $region38: #{spade_forward.1} parent=35 // pred_check_branch
        %446 = sbr.rel (%p444) target = $region40
      $region39: #{spade_forward.1} parent=35 // pred_region
        %s447 = smul.u32 2, %s20
      $region40: #{spade_forward.1} parent=35 // pred_fallthru
        _
    $region36: #{spade_forward.1} parent=5 // pred_fallthru
      _
    %p448 = scmp.le.s32.totalorder 2, %s10
    // Predicated region
    $region41: #{spade_forward.1} parent=5 // pred_check
      %p449 = pneg %p448
    $region42: #{spade_forward.1} parent=5 // pred_check_branch
      %451 = sbr.rel (%p449) target = $region44
    $region43: #{spade_forward.1} parent=5 // pred_region
      %s452 = ssub.s32 %s10, 2
      // Predicated region
      $region45: #{spade_forward.1} parent=43 // pred_check
        %p453 = pneg %p151
      $region46: #{spade_forward.1} parent=43 // pred_check_branch
        %455 = sbr.rel (%p453) target = $region48
      $region47: #{spade_forward.1} parent=43 // pred_region
        %s456 = smul.u32 2, %s22
        %p457 = scmp.lt.s32.totalorder %s21, 1
        %s458 = scalar_select %p457, %s21, 1
        %p459 = scmp.lt.s32.totalorder %s456, 1
        %s460 = scalar_select %p459, %s456, 1
        %s461 = smul.addr %s458, 2
        %s462 = sadd.s32 %s460, %s461
        %s463 = smul.addr %s462, 4
        %s464 = scalar_lea.vmem %s4, %s463
      $region48: #{spade_forward.1} parent=43 // pred_fallthru
        _
    $region44: #{spade_forward.1} parent=5 // pred_fallthru
      _
  $region6: #{spade_forward.1} parent=0 // loop_footer
    %s14 = sadd.s32 1, %s10
  $region7: #{spade_forward.1} parent=0 // loop_footer_branch
    %9 = sbr.rel target = $region3
  $region8: #{spade_forward.1} parent=0 // loop_exit
    _

</llo_original>
